<compile_context>
chip_gen: v5e
topology: v5e:2x2
jax: 0.10.0
libtpu: 0.0.40
codegen_flags: <defaults>
</compile_context>

<pallas_src>
import functools

import jax
import jax.numpy as jnp
from jax.experimental import pallas as pl
from jax.experimental.pallas import tpu as pltpu

AMBIENT_DIM = 30
CODE_DIM = 20
NLIN = 4
HIDDEN1 = 128
HIDDEN2 = 64

PAD = 128       # padded feature width inside the kernel (one full lane group)
PAD_IN = 32     # layer-0 K padded to a multiple of the bf16 sublane pack (16)
NUM_LAYERS = 5  # after collapsing the 6 activation-free linears into one


def _round_up(n, m):
    return ((n + m - 1) // m) * m


def _cdiv(a, b):
    return -(-a // b)


def _bf16_activations_default():
    """bf16 inter-layer activations on chips with a bf16 VPU (v6e/v7x); f32 elsewhere."""
    try:
        kind = jax.devices()[0].device_kind.lower()
    except Exception:
        return False
    return ("v6" in kind) or ("v7" in kind) or ("7x" in kind)


# ----------------------------------------------------------------------------- kernel
def ae_kernel(x_ref, w_ref, b_ref, o_ref, *, act_dtype):
    """x_ref: (TB, 32) f32 (cols 30..31 zero), w_ref: (5, 128, 128) bf16 (zero-padded),
    b_ref: (5, 128) f32 (zero-padded), o_ref: (TB, 30) f32.
    act_dtype: jnp.bfloat16 on v6e/v7x (bf16 VALU), jnp.float32 on v5e."""
    h = x_ref[...].astype(jnp.bfloat16)                               # (TB, 32)

    # Layer 0: 30(->32) -> 128, ReLU.  K=32 keeps the weight slice sublane-aligned,
    # avoiding a per-grid-step relayout copy.  Padded rows/cols are exactly zero.
    h = jnp.dot(h, w_ref[0, :PAD_IN, :], preferred_element_type=jnp.float32)
    h = jnp.maximum(h.astype(act_dtype) + b_ref[0:1, :].astype(act_dtype), 0.0)

    # Layers 1..3 run at the padded 128 width.  Padded weight rows/cols and bias lanes
    # are zero and ReLU(0) = 0, so the padding lanes of h stay exactly 0.
    #   layer 1: 128 -> 64  (ReLU)
    #   layer 2: 64  -> 64  collapsed (64->20, 4x 20->20, 20->64) followed by ReLU
    #   layer 3: 64  -> 128 (ReLU)
    for l in (1, 2, 3):
        h = jnp.dot(h.astype(jnp.bfloat16), w_ref[l],
                    preferred_element_type=jnp.float32)
        h = jnp.maximum(h.astype(act_dtype) + b_ref[l:l + 1, :].astype(act_dtype), 0.0)

    # Layer 4: 128 -> 30, no activation.  f32 epilogue regardless of act_dtype.
    h = jnp.dot(h.astype(jnp.bfloat16), w_ref[4], preferred_element_type=jnp.float32)
    h = h + b_ref[4:5, :]
    o_ref[...] = h[:, :AMBIENT_DIM].astype(o_ref.dtype)


# ----------------------------------------------------------------------------- wrapper
def _choose_tiling(batch, tile_b):
    """Pick (TILE_B, B_pad) with an EVEN number of grid steps (>=2 whenever the batch
    spans more than one 8-row tile) so the 'parallel' batch axis balances across the
    two TensorCores on v7x, while keeping padding small."""
    b8 = _round_up(batch, 8)
    if b8 <= 8:
        return b8, b8                                  # single tiny tile
    n_steps = max(2, _cdiv(b8, max(8, tile_b)))
    if n_steps % 2:
        n_steps += 1
    tile = _round_up(_cdiv(b8, n_steps), 8)
    return tile, n_steps * tile


def autoencoder_forward(x, w_packed, b_packed, *, tile_b=1024, bf16_activations=None):
    """x: (B, 30) f32 -> xhat: (B, 30) f32."""
    if bf16_activations is None:
        bf16_activations = _bf16_activations_default()
    act_dtype = jnp.bfloat16 if bf16_activations else jnp.float32

    B = x.shape[0]
    tile_b = min(int(tile_b), 2048)   # cap keeps working set small on every generation
    TILE_B, B_pad = _choose_tiling(B, tile_b)

    # Pad batch rows to B_pad and features 30 -> 32 (sublane alignment for layer 0).
    x_p = jnp.zeros((B_pad, PAD_IN), x.dtype).at[:B, :AMBIENT_DIM].set(x)

    out = pl.pallas_call(
        functools.partial(ae_kernel, act_dtype=act_dtype),
        out_shape=jax.ShapeDtypeStruct((B_pad, AMBIENT_DIM), jnp.float32),
        grid=(B_pad // TILE_B,),
        in_specs=[
            pl.BlockSpec((TILE_B, PAD_IN), lambda i: (i, 0)),            # x tiles
            pl.BlockSpec((NUM_LAYERS, PAD, PAD), lambda i: (0, 0, 0)),   # weights (VMEM resident)
            pl.BlockSpec((NUM_LAYERS, PAD), lambda i: (0, 0)),           # biases  (VMEM resident)
        ],
        out_specs=pl.BlockSpec((TILE_B, AMBIENT_DIM), lambda i: (i, 0)),
        compiler_params=pltpu.CompilerParams(
            dimension_semantics=("parallel",),       # megacore sharding of batch axis (v7x)
            vmem_limit_bytes=32 * 1024 * 1024),      # raise v5e's 16 MiB scoped default
    )(x_p, w_packed, b_packed)
    return out[:B]


# ----------------------------------------------------------------------------- params
def init_params(key):
    """PyTorch-style Linear init.  Weights stored as (in, out), biases as (out,)."""
    layer_dims = (
        [(AMBIENT_DIM, HIDDEN1), (HIDDEN1, HIDDEN2), (HIDDEN2, CODE_DIM)]
        + [(CODE_DIM, CODE_DIM)] * NLIN
        + [(CODE_DIM, HIDDEN2), (HIDDEN2, HIDDEN1), (HIDDEN1, AMBIENT_DIM)]
    )
    Ws, bs = [], []
    for (fan_in, fan_out) in layer_dims:
        key, kw, kb = jax.random.split(key, 3)
        bound = 1.0 / jnp.sqrt(float(fan_in))
        Ws.append(jax.random.uniform(kw, (fan_in, fan_out), jnp.float32,
                                     minval=-bound, maxval=bound))
        bs.append(jax.random.uniform(kb, (fan_out,), jnp.float32,
                                     minval=-bound, maxval=bound))
    return Ws, bs


def pack_params(params):
    """Collapse the 6 activation-free linears into one 64->64 layer, then pad every
    layer to 128x128 / 128 and stack into (5,128,128) bf16 weights + (5,128) f32 biases.
    NOTE: the collapse is mathematically exact but differs from PyTorch by f32 rounding;
    keep the per-layer path if bit-exact parity is required."""
    Ws, bs = params
    W_eff = Ws[2]
    b_eff = bs[2]
    for i in range(3, 8):                       # 4x bottleneck linears + decoder's first
        b_eff = b_eff @ Ws[i] + bs[i]
        W_eff = W_eff @ Ws[i]
    layers = [(Ws[0], bs[0]), (Ws[1], bs[1]), (W_eff, b_eff), (Ws[8], bs[8]), (Ws[9], bs[9])]

    w_packed = jnp.zeros((NUM_LAYERS, PAD, PAD), jnp.float32)
    b_packed = jnp.zeros((NUM_LAYERS, PAD), jnp.float32)
    for l, (w, b) in enumerate(layers):
        fi, fo = w.shape
        w_packed = w_packed.at[l, :fi, :fo].set(w)
        b_packed = b_packed.at[l, :fo].set(b)
    return w_packed.astype(jnp.bfloat16), b_packed


# ----------------------------------------------------------------------------- references
def autoencoder_ref_f32(x, params):
    """Pure-JAX f32 reference with the original (uncollapsed) PyTorch structure."""
    Ws, bs = params
    h = x
    h = jnp.maximum(h @ Ws[0] + bs[0], 0.0)
    h = jnp.maximum(h @ Ws[1] + bs[1], 0.0)
    h = h @ Ws[2] + bs[2]
    for i in range(3, 7):
        h = h @ Ws[i] + bs[i]
    h = jnp.maximum(h @ Ws[7] + bs[7], 0.0)
    h = jnp.maximum(h @ Ws[8] + bs[8], 0.0)
    h = h @ Ws[9] + bs[9]
    return h


def autoencoder_ref_packed(x, w_packed, b_packed, *, bf16_activations):
    """Pure-JAX reference matching the kernel's exact precision path
    (bf16 MXU operands, f32 accumulation, act_dtype elementwise)."""
    act = jnp.bfloat16 if bf16_activations else jnp.float32
    h = jnp.dot(x.astype(jnp.bfloat16), w_packed[0, :AMBIENT_DIM, :],
                preferred_element_type=jnp.float32)
    h = jnp.maximum(h.astype(act) + b_packed[0].astype(act), 0.0)
    for l in (1, 2, 3):
        h = jnp.dot(h.astype(jnp.bfloat16), w_packed[l],
                    preferred_element_type=jnp.float32)
        h = jnp.maximum(h.astype(act) + b_packed[l].astype(act), 0.0)
    h = jnp.dot(h.astype(jnp.bfloat16), w_packed[4],
                preferred_element_type=jnp.float32)
    h = h + b_packed[4]
    return h[:, :AMBIENT_DIM]


# ----------------------------------------------------------------------------- main
if __name__ == "__main__":
    key = jax.random.PRNGKey(0)
    key_x, key_x2, key_p = jax.random.split(key, 3)

    params = init_params(key_p)
    w_packed, b_packed = pack_params(params)
    use_bf16 = _bf16_activations_default()

    # Small batch: single grid step.
    B = 8
    x = jax.random.normal(key_x, (B, AMBIENT_DIM), jnp.float32)
    xhat = jax.block_until_ready(
        autoencoder_forward(x, w_packed, b_packed, bf16_activations=use_bf16))
    assert xhat.shape == (B, AMBIENT_DIM)
    assert jnp.allclose(
        xhat, autoencoder_ref_packed(x, w_packed, b_packed, bf16_activations=use_bf16),
        atol=2e-3, rtol=2e-3)
    assert jnp.allclose(xhat, autoencoder_ref_f32(x, params), atol=1e-1, rtol=1e-1)

    # Larger batch: exercises the multi-tile grid (even step count) + ragged padding.
    B2 = 600
    x2 = jax.random.normal(key_x2, (B2, AMBIENT_DIM), jnp.float32)
    xhat2 = jax.block_until_ready(
        autoencoder_forward(x2, w_packed, b_packed, bf16_activations=use_bf16))
    assert xhat2.shape == (B2, AMBIENT_DIM)
    assert jnp.allclose(
        xhat2, autoencoder_ref_packed(x2, w_packed, b_packed, bf16_activations=use_bf16),
        atol=2e-3, rtol=2e-3)
    assert jnp.allclose(xhat2, autoencoder_ref_f32(x2, params), atol=1e-1, rtol=1e-1)

    print("KERNEL_OK")
</pallas_src>

<mosaic_0001>
module attributes {stable_mosaic.version = 11 : i64} {
  func.func @ae_kernel(%arg0: i32, %arg1: memref<8x32xf32, #tpu.memory_space<vmem>>, %arg2: memref<5x128x128xbf16, #tpu.memory_space<vmem>>, %arg3: memref<5x128xf32, #tpu.memory_space<vmem>>, %arg4: memref<8x30xf32, #tpu.memory_space<vmem>>) attributes {dimension_semantics = [#tpu.dimension_semantics<parallel>], iteration_bounds = array<i64: 1>, scalar_prefetch = 0 : i64, scratch_operands = 0 : i64, tpu.core_type = #tpu.core_type<tc>, window_params = [{transform_indices = @transform_0, window_bounds = array<i64: 8, 32>}, {pipeline_mode = #tpu.pipeline_mode<synchronous>, transform_indices = @transform_1, window_bounds = array<i64: 5, 128, 128>}, {pipeline_mode = #tpu.pipeline_mode<synchronous>, transform_indices = @transform_2, window_bounds = array<i64: 5, 128>}, {transform_indices = @transform_3, window_bounds = array<i64: 8, 30>}]} {
    %c0 = arith.constant 0 : index
    %c0_0 = arith.constant 0 : index
    %0 = vector.load %arg1[%c0, %c0_0] : memref<8x32xf32, #tpu.memory_space<vmem>>, vector<8x32xf32>
    %1 = arith.truncf %0 : vector<8x32xf32> to vector<8x32xbf16>
    %c0_1 = arith.constant 0 : index
    %c0_2 = arith.constant 0 : index
    %c0_3 = arith.constant 0 : index
    %2 = vector.load %arg2[%c0_1, %c0_2, %c0_3] : memref<5x128x128xbf16, #tpu.memory_space<vmem>>, vector<1x32x128xbf16>
    %3 = vector.shape_cast %2 : vector<1x32x128xbf16> to vector<32x128xbf16>
    %cst = arith.constant dense<0.000000e+00> : vector<8x128xf32>
    %4 = tpu.matmul %1, %3, %cst {dimension_numbers = #tpu.dot_dimension_numbers<[1], [0], [0], [1], [0, 0, 1, 1], [], []>} : vector<8x32xbf16>, vector<32x128xbf16>, vector<8x128xf32> -> vector<8x128xf32>
    %c0_4 = arith.constant 0 : index
    %c0_5 = arith.constant 0 : index
    %5 = vector.load %arg3[%c0_4, %c0_5] : memref<5x128xf32, #tpu.memory_space<vmem>>, vector<1x128xf32>
    %6 = vector.broadcast %5 : vector<1x128xf32> to vector<8x128xf32>
    %7 = arith.addf %4, %6 : vector<8x128xf32>
    %cst_6 = arith.constant 0.000000e+00 : f32
    %8 = vector.broadcast %cst_6 : f32 to vector<8x128xf32>
    %9 = arith.maximumf %7, %8 : vector<8x128xf32>
    %10 = arith.truncf %9 : vector<8x128xf32> to vector<8x128xbf16>
    %c1 = arith.constant 1 : index
    %c0_7 = arith.constant 0 : index
    %c0_8 = arith.constant 0 : index
    %11 = vector.load %arg2[%c1, %c0_7, %c0_8] : memref<5x128x128xbf16, #tpu.memory_space<vmem>>, vector<1x128x128xbf16>
    %12 = vector.shape_cast %11 : vector<1x128x128xbf16> to vector<128x128xbf16>
    %cst_9 = arith.constant dense<0.000000e+00> : vector<8x128xf32>
    %13 = tpu.matmul %10, %12, %cst_9 {dimension_numbers = #tpu.dot_dimension_numbers<[1], [0], [0], [1], [0, 0, 1, 1], [], []>} : vector<8x128xbf16>, vector<128x128xbf16>, vector<8x128xf32> -> vector<8x128xf32>
    %c1_10 = arith.constant 1 : index
    %c0_11 = arith.constant 0 : index
    %14 = vector.load %arg3[%c1_10, %c0_11] : memref<5x128xf32, #tpu.memory_space<vmem>>, vector<1x128xf32>
    %15 = vector.broadcast %14 : vector<1x128xf32> to vector<8x128xf32>
    %16 = arith.addf %13, %15 : vector<8x128xf32>
    %cst_12 = arith.constant 0.000000e+00 : f32
    %17 = vector.broadcast %cst_12 : f32 to vector<8x128xf32>
    %18 = arith.maximumf %16, %17 : vector<8x128xf32>
    %19 = arith.truncf %18 : vector<8x128xf32> to vector<8x128xbf16>
    %c2 = arith.constant 2 : index
    %c0_13 = arith.constant 0 : index
    %c0_14 = arith.constant 0 : index
    %20 = vector.load %arg2[%c2, %c0_13, %c0_14] : memref<5x128x128xbf16, #tpu.memory_space<vmem>>, vector<1x128x128xbf16>
    %21 = vector.shape_cast %20 : vector<1x128x128xbf16> to vector<128x128xbf16>
    %cst_15 = arith.constant dense<0.000000e+00> : vector<8x128xf32>
    %22 = tpu.matmul %19, %21, %cst_15 {dimension_numbers = #tpu.dot_dimension_numbers<[1], [0], [0], [1], [0, 0, 1, 1], [], []>} : vector<8x128xbf16>, vector<128x128xbf16>, vector<8x128xf32> -> vector<8x128xf32>
    %c2_16 = arith.constant 2 : index
    %c0_17 = arith.constant 0 : index
    %23 = vector.load %arg3[%c2_16, %c0_17] : memref<5x128xf32, #tpu.memory_space<vmem>>, vector<1x128xf32>
    %24 = vector.broadcast %23 : vector<1x128xf32> to vector<8x128xf32>
    %25 = arith.addf %22, %24 : vector<8x128xf32>
    %cst_18 = arith.constant 0.000000e+00 : f32
    %26 = vector.broadcast %cst_18 : f32 to vector<8x128xf32>
    %27 = arith.maximumf %25, %26 : vector<8x128xf32>
    %28 = arith.truncf %27 : vector<8x128xf32> to vector<8x128xbf16>
    %c3 = arith.constant 3 : index
    %c0_19 = arith.constant 0 : index
    %c0_20 = arith.constant 0 : index
    %29 = vector.load %arg2[%c3, %c0_19, %c0_20] : memref<5x128x128xbf16, #tpu.memory_space<vmem>>, vector<1x128x128xbf16>
    %30 = vector.shape_cast %29 : vector<1x128x128xbf16> to vector<128x128xbf16>
    %cst_21 = arith.constant dense<0.000000e+00> : vector<8x128xf32>
    %31 = tpu.matmul %28, %30, %cst_21 {dimension_numbers = #tpu.dot_dimension_numbers<[1], [0], [0], [1], [0, 0, 1, 1], [], []>} : vector<8x128xbf16>, vector<128x128xbf16>, vector<8x128xf32> -> vector<8x128xf32>
    %c3_22 = arith.constant 3 : index
    %c0_23 = arith.constant 0 : index
    %32 = vector.load %arg3[%c3_22, %c0_23] : memref<5x128xf32, #tpu.memory_space<vmem>>, vector<1x128xf32>
    %33 = vector.broadcast %32 : vector<1x128xf32> to vector<8x128xf32>
    %34 = arith.addf %31, %33 : vector<8x128xf32>
    %cst_24 = arith.constant 0.000000e+00 : f32
    %35 = vector.broadcast %cst_24 : f32 to vector<8x128xf32>
    %36 = arith.maximumf %34, %35 : vector<8x128xf32>
    %37 = arith.truncf %36 : vector<8x128xf32> to vector<8x128xbf16>
    %c4 = arith.constant 4 : index
    %c0_25 = arith.constant 0 : index
    %c0_26 = arith.constant 0 : index
    %38 = vector.load %arg2[%c4, %c0_25, %c0_26] : memref<5x128x128xbf16, #tpu.memory_space<vmem>>, vector<1x128x128xbf16>
    %39 = vector.shape_cast %38 : vector<1x128x128xbf16> to vector<128x128xbf16>
    %cst_27 = arith.constant dense<0.000000e+00> : vector<8x128xf32>
    %40 = tpu.matmul %37, %39, %cst_27 {dimension_numbers = #tpu.dot_dimension_numbers<[1], [0], [0], [1], [0, 0, 1, 1], [], []>} : vector<8x128xbf16>, vector<128x128xbf16>, vector<8x128xf32> -> vector<8x128xf32>
    %c4_28 = arith.constant 4 : index
    %c0_29 = arith.constant 0 : index
    %41 = vector.load %arg3[%c4_28, %c0_29] : memref<5x128xf32, #tpu.memory_space<vmem>>, vector<1x128xf32>
    %42 = vector.broadcast %41 : vector<1x128xf32> to vector<8x128xf32>
    %43 = arith.addf %40, %42 : vector<8x128xf32>
    %44 = vector.extract_strided_slice %43 {offsets = [0, 0], sizes = [8, 30], strides = [1, 1]} : vector<8x128xf32> to vector<8x30xf32>
    %c0_30 = arith.constant 0 : index
    %c0_31 = arith.constant 0 : index
    %45 = vector.load %arg4[%c0_30, %c0_31] : memref<8x30xf32, #tpu.memory_space<vmem>>, vector<8x30xf32>
    tpu.vector_store %arg4[%c0_30, %c0_31], %44 {strides = array<i32>} : memref<8x30xf32, #tpu.memory_space<vmem>>, vector<8x30xf32>,
    return
  }
  func.func @transform_0(%arg0: i32) -> (i32, i32) {
    %c0_i32 = arith.constant 0 : i32
    %c0_i32_0 = arith.constant 0 : i32
    return %arg0, %c0_i32 : i32, i32
  }
  func.func @transform_1(%arg0: i32) -> (i32, i32, i32) {
    %c0_i32 = arith.constant 0 : i32
    %c0_i32_0 = arith.constant 0 : i32
    %c0_i32_1 = arith.constant 0 : i32
    %c0_i32_2 = arith.constant 0 : i32
    return %c0_i32, %c0_i32_0, %c0_i32_1 : i32, i32, i32
  }
  func.func @transform_2(%arg0: i32) -> (i32, i32) {
    %c0_i32 = arith.constant 0 : i32
    %c0_i32_0 = arith.constant 0 : i32
    %c0_i32_1 = arith.constant 0 : i32
    return %c0_i32, %c0_i32_0 : i32, i32
  }
  func.func @transform_3(%arg0: i32) -> (i32, i32) {
    %c0_i32 = arith.constant 0 : i32
    %c0_i32_0 = arith.constant 0 : i32
    return %arg0, %c0_i32 : i32, i32
  }
}

</mosaic_0001>

<llo_original>
// kernel: tpu_custom_call.1
$region0: #{tpu_custom_call.1}
  #allocation0 [shape = 'u32[]', space=smem, size = 0x4, offset = 0x4, fixed_abs, tag = 'smem constant byte address 0x4 - core index']
  #allocation1 [shape = 'u32[72,128]{1,0:T(1,128)}', space=vmem, size = 0x9000, scoped, tag = 'internal scratch']
  %s0 = inlined_call_operand.hbm [shape: f32[8,32], index: 0, kind: input, shape index: {}]
  %s1 = inlined_call_operand.hbm [shape: bf16[5,128,128], index: 1, kind: input, shape index: {}]
  %s2 = inlined_call_operand.hbm [shape: f32[5,128], index: 2, kind: input, shape index: {}]
  %s3 = inlined_call_operand.hbm [shape: f32[8,30], index: 3, kind: output, shape index: {}]
  %s4 = sld [smem:[#allocation0]]
  $region34: #{tpu_custom_call.1} parent=0
    _
  %s6 = ssub.s32 1, %s4
  %s7 = scalar_select 0, %s6, %s4
  $region1: #{tpu_custom_call.1} parent=0
    #allocation2 [shape = 'u8[4096]{0}', space=vmem, size = 0x1000, scoped, tag = 'input window, operand 0, single buffered']
    #allocation3 [shape = 's32[1]{0}', space=sflag, size = 0x4, scoped, tag = 'scoped memory for tpu_custom_call.1']
    #allocation4 [shape = 's32[1]{0}', space=sflag, size = 0x4, scoped, tag = 'scoped memory for tpu_custom_call.1']
    #allocation5 [shape = 'u8[163840]{0}', space=vmem, size = 0x28000, scoped, tag = 'input window, operand 1, single buffered']
    #allocation6 [shape = 's32[1]{0}', space=sflag, size = 0x4, scoped, tag = 'scoped memory for tpu_custom_call.1']
    #allocation7 [shape = 'u8[4096]{0}', space=vmem, size = 0x1000, scoped, tag = 'input window, operand 2, single buffered']
    #allocation8 [shape = 'u8[4096]{0}', space=vmem, size = 0x1000, scoped, tag = 'output window, operand 0, single buffered']
    %8 = vsyncpa [#allocation3], 0
    %9 = vsyncpa [#allocation6], 0
    %10 = vsyncpa [#allocation4], 0
    // Predicated region
    $region2: #{tpu_custom_call.1} parent=1 // pred_check
      _
    $region3: #{tpu_custom_call.1} parent=1 // pred_check_branch
      %12 = sbr.rel (0) target = $region5
    $region4: #{tpu_custom_call.1} parent=1 // pred_region
      %14 = vsyncadd [#allocation3], 0
      %s16 = sshll.u32 %s0, 4
      %s17 = int_to_ptr.hbm [resolvable:$true] %s16
      %s18 = sshll.u32 [#allocation2], 4
      %s19 = int_to_ptr.vmem [resolvable:$true] %s18
      %21 = dma.hbm_to_vmem [thread:$0]  %s17, 128, %s19, [#allocation3]
    $region5: #{tpu_custom_call.1} parent=1 // pred_fallthru
      _
    // Predicated region
    $region6: #{tpu_custom_call.1} parent=1 // pred_check
      _
    $region7: #{tpu_custom_call.1} parent=1 // pred_check_branch
      %23 = sbr.rel (0) target = $region9
    $region8: #{tpu_custom_call.1} parent=1 // pred_region
      %25 = vsyncadd [#allocation6], 0
      %s26 = sshll.u32 %s1, 4
      %s27 = int_to_ptr.hbm [resolvable:$true] %s26
      %s28 = sshll.u32 [#allocation5], 4
      %s29 = int_to_ptr.vmem [resolvable:$true] %s28
      %34 = dma.hbm_to_vmem [thread:$0]  %s27, 5120, %s29, [#allocation6], 64, 64, 4
    $region9: #{tpu_custom_call.1} parent=1 // pred_fallthru
      _
    // Predicated region
    $region10: #{tpu_custom_call.1} parent=1 // pred_check
      _
    $region11: #{tpu_custom_call.1} parent=1 // pred_check_branch
      %36 = sbr.rel (0) target = $region13
    $region12: #{tpu_custom_call.1} parent=1 // pred_region
      %38 = vsyncadd [#allocation6], 0
      %s40 = sshll.u32 %s2, 4
      %s41 = int_to_ptr.hbm [resolvable:$true] %s40
      %s42 = sshll.u32 [#allocation7], 4
      %s43 = int_to_ptr.vmem [resolvable:$true] %s42
      %45 = dma.hbm_to_vmem [thread:$0]  %s41, 128, %s43, [#allocation6]
    $region13: #{tpu_custom_call.1} parent=1 // pred_fallthru
      _
    // Predicated region
    $region14: #{tpu_custom_call.1} parent=1 // pred_check
      _
    $region15: #{tpu_custom_call.1} parent=1 // pred_check_branch
      %47 = sbr.rel (0) target = $region17
    $region16: #{tpu_custom_call.1} parent=1 // pred_region
      %49 = dma.done [#allocation3], 128
    $region17: #{tpu_custom_call.1} parent=1 // pred_fallthru
      _
    // Predicated region
    $region18: #{tpu_custom_call.1} parent=1 // pred_check
      _
    $region19: #{tpu_custom_call.1} parent=1 // pred_check_branch
      %51 = sbr.rel (0) target = $region21
    $region20: #{tpu_custom_call.1} parent=1 // pred_region
      %53 = dma.done [#allocation6], 5120
    $region21: #{tpu_custom_call.1} parent=1 // pred_fallthru
      _
    // Predicated region
    $region22: #{tpu_custom_call.1} parent=1 // pred_check
      _
    $region23: #{tpu_custom_call.1} parent=1 // pred_check_branch
      %55 = sbr.rel (0) target = $region25
    $region24: #{tpu_custom_call.1} parent=1 // pred_region
      %57 = dma.done [#allocation6], 128
    $region25: #{tpu_custom_call.1} parent=1 // pred_fallthru
      _
    %v59 = vld [vmem:[#allocation2] sm:$0xff]
    %v60 = vpack.c.bf16 %v59, %v59
    %v61 = vld [vmem:[#allocation5] sm:$0xf]
    %v62 = vld [vmem:[#allocation5 + $0x4] sm:$0xf]
    %v63 = vld [vmem:[#allocation5 + $0x8] sm:$0xf]
    %v64 = vld [vmem:[#allocation5 + $0xc] sm:$0xf]
    %v65 = vld [vmem:[#allocation7] sm:$0x1]
    %v66 = vperm.slane %v65, 0
    %v71 = vunpack.c.l.b16 %v61
    %v72 = vunpack.c.l.b16 %v62
    %v73 = vunpack.c.l.b16 %v63
    %v74 = vunpack.c.l.b16 %v64
    %v75 = vpack.c.b16 %v72, %v71
    %v76 = vpack.c.b16 %v74, %v73
    %vm79 = vcmask 261120
    %v81 = vsel %vm79, %v60, 0
    %83 = vmatpush.bf16.msra.mxu0 0
    %84 = vmatpush.bf16.msra.mxu0 0
    %85 = vmatpush.bf16.msra.mxu0 0
    %86 = vmatpush.bf16.msra.mxu0 0
    %87 = vmatpush.bf16.msra.mxu0 0
    %88 = vmatpush.bf16.msra.mxu0 0
    %89 = vmatpush.bf16.msra.mxu0 %v76
    %90 = vmatpush.bf16.msra.mxu0 %v75
    %91 = vmatmul.bf16.gmra.mxu0 %v81
    %v92 = vpop.f32.mrf.mxu0
    %v93 = vadd.f32 %v66, %v92
    %v94 = vpop.f32.mrf.mxu0
    %95 = vdwg.mxu0
    %v96 = vmax.f32 %v93, 0.0
    %v97 = vpack.c.bf16 %v96, %v96
    %s98 = scalar_lea.vmem [#allocation5], 64
    %v99 = vld [vmem:[%s98] sm:$0xf]
    %v100 = vld [vmem:[%s98 + $0x4] sm:$0xf]
    %v101 = vld [vmem:[%s98 + $0x8] sm:$0xf]
    %v102 = vld [vmem:[%s98 + $0xc] sm:$0xf]
    %v103 = vld [vmem:[%s98 + $0x10] sm:$0xf]
    %v104 = vld [vmem:[%s98 + $0x14] sm:$0xf]
    %v105 = vld [vmem:[%s98 + $0x18] sm:$0xf]
    %v106 = vld [vmem:[%s98 + $0x1c] sm:$0xf]
    %v107 = vld [vmem:[%s98 + $0x20] sm:$0xf]
    %v108 = vld [vmem:[%s98 + $0x24] sm:$0xf]
    %v109 = vld [vmem:[%s98 + $0x28] sm:$0xf]
    %v110 = vld [vmem:[%s98 + $0x2c] sm:$0xf]
    %v111 = vld [vmem:[%s98 + $0x30] sm:$0xf]
    %v112 = vld [vmem:[%s98 + $0x34] sm:$0xf]
    %v113 = vld [vmem:[%s98 + $0x38] sm:$0xf]
    %v114 = vld [vmem:[%s98 + $0x3c] sm:$0xf]
    %v115 = vld [vmem:[#allocation7 + $0x1] sm:$0x1]
    %v116 = vperm.slane %v115, 0
    %v133 = vunpack.c.l.b16 %v99
    %v134 = vunpack.c.l.b16 %v100
    %v135 = vunpack.c.l.b16 %v101
    %v136 = vunpack.c.l.b16 %v102
    %v137 = vunpack.c.l.b16 %v103
    %v138 = vunpack.c.l.b16 %v104
    %v139 = vunpack.c.l.b16 %v105
    %v140 = vunpack.c.l.b16 %v106
    %v141 = vunpack.c.l.b16 %v107
    %v142 = vunpack.c.l.b16 %v108
    %v143 = vunpack.c.l.b16 %v109
    %v144 = vunpack.c.l.b16 %v110
    %v145 = vunpack.c.l.b16 %v111
    %v146 = vunpack.c.l.b16 %v112
    %v147 = vunpack.c.l.b16 %v113
    %v148 = vunpack.c.l.b16 %v114
    %v149 = vpack.c.b16 %v134, %v133
    %v150 = vpack.c.b16 %v136, %v135
    %v151 = vpack.c.b16 %v138, %v137
    %v152 = vpack.c.b16 %v140, %v139
    %v153 = vpack.c.b16 %v142, %v141
    %v154 = vpack.c.b16 %v144, %v143
    %v155 = vpack.c.b16 %v146, %v145
    %v156 = vpack.c.b16 %v148, %v147
    %165 = vmatpush.bf16.msra.mxu0 %v156
    %166 = vmatpush.bf16.msra.mxu0 %v155
    %167 = vmatpush.bf16.msra.mxu0 %v154
    %168 = vmatpush.bf16.msra.mxu0 %v153
    %169 = vmatpush.bf16.msra.mxu0 %v152
    %170 = vmatpush.bf16.msra.mxu0 %v151
    %171 = vmatpush.bf16.msra.mxu0 %v150
    %172 = vmatpush.bf16.msra.mxu0 %v149
    %173 = vmatmul.bf16.gmra.mxu0 %v97
    %v174 = vpop.f32.mrf.mxu0
    %v175 = vadd.f32 %v116, %v174
    %v176 = vpop.f32.mrf.mxu0
    %177 = vdwg.mxu0
    %v178 = vmax.f32 %v175, 0.0
    %v179 = vpack.c.bf16 %v178, %v178
    %s180 = scalar_lea.vmem [#allocation5], 128
    %v181 = vld [vmem:[%s180] sm:$0xf]
    %v182 = vld [vmem:[%s180 + $0x4] sm:$0xf]
    %v183 = vld [vmem:[%s180 + $0x8] sm:$0xf]
    %v184 = vld [vmem:[%s180 + $0xc] sm:$0xf]
    %v185 = vld [vmem:[%s180 + $0x10] sm:$0xf]
    %v186 = vld [vmem:[%s180 + $0x14] sm:$0xf]
    %v187 = vld [vmem:[%s180 + $0x18] sm:$0xf]
    %v188 = vld [vmem:[%s180 + $0x1c] sm:$0xf]
    %v189 = vld [vmem:[%s180 + $0x20] sm:$0xf]
    %v190 = vld [vmem:[%s180 + $0x24] sm:$0xf]
    %v191 = vld [vmem:[%s180 + $0x28] sm:$0xf]
    %v192 = vld [vmem:[%s180 + $0x2c] sm:$0xf]
    %v193 = vld [vmem:[%s180 + $0x30] sm:$0xf]
    %v194 = vld [vmem:[%s180 + $0x34] sm:$0xf]
    %v195 = vld [vmem:[%s180 + $0x38] sm:$0xf]
    %v196 = vld [vmem:[%s180 + $0x3c] sm:$0xf]
    %v197 = vld [vmem:[#allocation7 + $0x2] sm:$0x1]
    %v198 = vperm.slane %v197, 0
    %v215 = vunpack.c.l.b16 %v181
    %v216 = vunpack.c.l.b16 %v182
    %v217 = vunpack.c.l.b16 %v183
    %v218 = vunpack.c.l.b16 %v184
    %v219 = vunpack.c.l.b16 %v185
    %v220 = vunpack.c.l.b16 %v186
    %v221 = vunpack.c.l.b16 %v187
    %v222 = vunpack.c.l.b16 %v188
    %v223 = vunpack.c.l.b16 %v189
    %v224 = vunpack.c.l.b16 %v190
    %v225 = vunpack.c.l.b16 %v191
    %v226 = vunpack.c.l.b16 %v192
    %v227 = vunpack.c.l.b16 %v193
    %v228 = vunpack.c.l.b16 %v194
    %v229 = vunpack.c.l.b16 %v195
    %v230 = vunpack.c.l.b16 %v196
    %v231 = vpack.c.b16 %v216, %v215
    %v232 = vpack.c.b16 %v218, %v217
    %v233 = vpack.c.b16 %v220, %v219
    %v234 = vpack.c.b16 %v222, %v221
    %v235 = vpack.c.b16 %v224, %v223
    %v236 = vpack.c.b16 %v226, %v225
    %v237 = vpack.c.b16 %v228, %v227
    %v238 = vpack.c.b16 %v230, %v229
    %247 = vmatpush.bf16.msra.mxu0 %v238
    %248 = vmatpush.bf16.msra.mxu0 %v237
    %249 = vmatpush.bf16.msra.mxu0 %v236
    %250 = vmatpush.bf16.msra.mxu0 %v235
    %251 = vmatpush.bf16.msra.mxu0 %v234
    %252 = vmatpush.bf16.msra.mxu0 %v233
    %253 = vmatpush.bf16.msra.mxu0 %v232
    %254 = vmatpush.bf16.msra.mxu0 %v231
    %255 = vmatmul.bf16.gmra.mxu0 %v179
    %v256 = vpop.f32.mrf.mxu0
    %v257 = vadd.f32 %v198, %v256
    %v258 = vpop.f32.mrf.mxu0
    %259 = vdwg.mxu0
    %v260 = vmax.f32 %v257, 0.0
    %v261 = vpack.c.bf16 %v260, %v260
    %s262 = scalar_lea.vmem [#allocation5], 192
    %v263 = vld [vmem:[%s262] sm:$0xf]
    %v264 = vld [vmem:[%s262 + $0x4] sm:$0xf]
    %v265 = vld [vmem:[%s262 + $0x8] sm:$0xf]
    %v266 = vld [vmem:[%s262 + $0xc] sm:$0xf]
    %v267 = vld [vmem:[%s262 + $0x10] sm:$0xf]
    %v268 = vld [vmem:[%s262 + $0x14] sm:$0xf]
    %v269 = vld [vmem:[%s262 + $0x18] sm:$0xf]
    %v270 = vld [vmem:[%s262 + $0x1c] sm:$0xf]
    %v271 = vld [vmem:[%s262 + $0x20] sm:$0xf]
    %v272 = vld [vmem:[%s262 + $0x24] sm:$0xf]
    %v273 = vld [vmem:[%s262 + $0x28] sm:$0xf]
    %v274 = vld [vmem:[%s262 + $0x2c] sm:$0xf]
    %v275 = vld [vmem:[%s262 + $0x30] sm:$0xf]
    %v276 = vld [vmem:[%s262 + $0x34] sm:$0xf]
    %v277 = vld [vmem:[%s262 + $0x38] sm:$0xf]
    %v278 = vld [vmem:[%s262 + $0x3c] sm:$0xf]
    %v279 = vld [vmem:[#allocation7 + $0x3] sm:$0x1]
    %v280 = vperm.slane %v279, 0
    %v297 = vunpack.c.l.b16 %v263
    %v298 = vunpack.c.l.b16 %v264
    %v299 = vunpack.c.l.b16 %v265
    %v300 = vunpack.c.l.b16 %v266
    %v301 = vunpack.c.l.b16 %v267
    %v302 = vunpack.c.l.b16 %v268
    %v303 = vunpack.c.l.b16 %v269
    %v304 = vunpack.c.l.b16 %v270
    %v305 = vunpack.c.l.b16 %v271
    %v306 = vunpack.c.l.b16 %v272
    %v307 = vunpack.c.l.b16 %v273
    %v308 = vunpack.c.l.b16 %v274
    %v309 = vunpack.c.l.b16 %v275
    %v310 = vunpack.c.l.b16 %v276
    %v311 = vunpack.c.l.b16 %v277
    %v312 = vunpack.c.l.b16 %v278
    %v313 = vpack.c.b16 %v298, %v297
    %v314 = vpack.c.b16 %v300, %v299
    %v315 = vpack.c.b16 %v302, %v301
    %v316 = vpack.c.b16 %v304, %v303
    %v317 = vpack.c.b16 %v306, %v305
    %v318 = vpack.c.b16 %v308, %v307
    %v319 = vpack.c.b16 %v310, %v309
    %v320 = vpack.c.b16 %v312, %v311
    %329 = vmatpush.bf16.msra.mxu0 %v320
    %330 = vmatpush.bf16.msra.mxu0 %v319
    %331 = vmatpush.bf16.msra.mxu0 %v318
    %332 = vmatpush.bf16.msra.mxu0 %v317
    %333 = vmatpush.bf16.msra.mxu0 %v316
    %334 = vmatpush.bf16.msra.mxu0 %v315
    %335 = vmatpush.bf16.msra.mxu0 %v314
    %336 = vmatpush.bf16.msra.mxu0 %v313
    %337 = vmatmul.bf16.gmra.mxu0 %v261
    %v338 = vpop.f32.mrf.mxu0
    %v339 = vadd.f32 %v280, %v338
    %v340 = vpop.f32.mrf.mxu0
    %341 = vdwg.mxu0
    %v342 = vmax.f32 %v339, 0.0
    %v343 = vpack.c.bf16 %v342, %v342
    %s344 = scalar_lea.vmem [#allocation5], 256
    %v345 = vld [vmem:[%s344] sm:$0xf]
    %v346 = vld [vmem:[%s344 + $0x4] sm:$0xf]
    %v347 = vld [vmem:[%s344 + $0x8] sm:$0xf]
    %v348 = vld [vmem:[%s344 + $0xc] sm:$0xf]
    %v349 = vld [vmem:[%s344 + $0x10] sm:$0xf]
    %v350 = vld [vmem:[%s344 + $0x14] sm:$0xf]
    %v351 = vld [vmem:[%s344 + $0x18] sm:$0xf]
    %v352 = vld [vmem:[%s344 + $0x1c] sm:$0xf]
    %v353 = vld [vmem:[%s344 + $0x20] sm:$0xf]
    %v354 = vld [vmem:[%s344 + $0x24] sm:$0xf]
    %v355 = vld [vmem:[%s344 + $0x28] sm:$0xf]
    %v356 = vld [vmem:[%s344 + $0x2c] sm:$0xf]
    %v357 = vld [vmem:[%s344 + $0x30] sm:$0xf]
    %v358 = vld [vmem:[%s344 + $0x34] sm:$0xf]
    %v359 = vld [vmem:[%s344 + $0x38] sm:$0xf]
    %v360 = vld [vmem:[%s344 + $0x3c] sm:$0xf]
    %v361 = vld [vmem:[#allocation7 + $0x4] sm:$0x1]
    %v362 = vperm.slane %v361, 0
    %v379 = vunpack.c.l.b16 %v345
    %v380 = vunpack.c.l.b16 %v346
    %v381 = vunpack.c.l.b16 %v347
    %v382 = vunpack.c.l.b16 %v348
    %v383 = vunpack.c.l.b16 %v349
    %v384 = vunpack.c.l.b16 %v350
    %v385 = vunpack.c.l.b16 %v351
    %v386 = vunpack.c.l.b16 %v352
    %v387 = vunpack.c.l.b16 %v353
    %v388 = vunpack.c.l.b16 %v354
    %v389 = vunpack.c.l.b16 %v355
    %v390 = vunpack.c.l.b16 %v356
    %v391 = vunpack.c.l.b16 %v357
    %v392 = vunpack.c.l.b16 %v358
    %v393 = vunpack.c.l.b16 %v359
    %v394 = vunpack.c.l.b16 %v360
    %v395 = vpack.c.b16 %v380, %v379
    %v396 = vpack.c.b16 %v382, %v381
    %v397 = vpack.c.b16 %v384, %v383
    %v398 = vpack.c.b16 %v386, %v385
    %v399 = vpack.c.b16 %v388, %v387
    %v400 = vpack.c.b16 %v390, %v389
    %v401 = vpack.c.b16 %v392, %v391
    %v402 = vpack.c.b16 %v394, %v393
    %411 = vmatpush.bf16.msra.mxu0 %v402
    %412 = vmatpush.bf16.msra.mxu0 %v401
    %413 = vmatpush.bf16.msra.mxu0 %v400
    %414 = vmatpush.bf16.msra.mxu0 %v399
    %415 = vmatpush.bf16.msra.mxu0 %v398
    %416 = vmatpush.bf16.msra.mxu0 %v397
    %417 = vmatpush.bf16.msra.mxu0 %v396
    %418 = vmatpush.bf16.msra.mxu0 %v395
    %419 = vmatmul.bf16.gmra.mxu0 %v343
    %v420 = vpop.f32.mrf.mxu0
    %v421 = vadd.f32 %v362, %v420
    %v422 = vpop.f32.mrf.mxu0
    %423 = vdwg.mxu0
    %vm424 = vcmask 244736
    %425 = vst.msk [vmem:[#allocation8] sm:$0xff] %vm424, %v421
    // Predicated region
    $region26: #{tpu_custom_call.1} parent=1 // pred_check
      _
    $region27: #{tpu_custom_call.1} parent=1 // pred_check_branch
      %427 = sbr.rel (0) target = $region29
    $region28: #{tpu_custom_call.1} parent=1 // pred_region
      %429 = vsyncadd [#allocation4], 0
      %s431 = sshll.u32 [#allocation8], 4
      %s432 = int_to_ptr.vmem [resolvable:$true] %s431
      %s433 = sshll.u32 %s3, 4
      %s434 = int_to_ptr.hbm [resolvable:$true] %s433
      %436 = dma.vmem_to_hbm [thread:$0]  %s432, 128, %s434, [#allocation4]
    $region29: #{tpu_custom_call.1} parent=1 // pred_fallthru
      _
    // Predicated region
    $region30: #{tpu_custom_call.1} parent=1 // pred_check
      _
    $region31: #{tpu_custom_call.1} parent=1 // pred_check_branch
      %438 = sbr.rel (0) target = $region33
    $region32: #{tpu_custom_call.1} parent=1 // pred_region
      %440 = dma.done [#allocation4], 128
    $region33: #{tpu_custom_call.1} parent=1 // pred_fallthru
      _
    %441 = vsyncpa [#allocation3], 1
    %442 = vsyncpa [#allocation6], 1
    %443 = vsyncpa [#allocation4], 1

</llo_original>
